<compile_context>
chip_gen: v7x
topology: tpu7x:2x2x1
jax: 0.10.0
libtpu: 0.0.40
codegen_flags: <defaults>
</compile_context>

<pallas_src>
import jax
import jax.numpy as jnp
from jax.experimental import pallas as pl
from jax.experimental.pallas import tpu as pltpu


# Rows kept above the image inside the scratch slabs.  Using 2 (not 1) keeps
# every scratch *store* (image fill, stage-1 writeback, halo zeroing) aligned to
# packed-bf16 sublane pairs; the dy-shifted *loads* may be odd-offset, which the
# compiler relayouts cheaply.
_PAD_TOP = 2


def _fused_conv_block_kernel(x_ref, w1_ref, b1_ref, w2_ref, b2_ref, o_ref,
                             xpad_s, mid_s):
    """Fused conv3x3+bias+ReLU -> conv3x3+bias+ReLU for NB images per grid step.

    x_ref : (NB, H, W*C1)          input rows, (W*C1) on lanes
    w1_ref: (3*WC1p, W*C2)         banded stage-1 weights, dy folded into K
    b1_ref: (1, W*C2)              stage-1 bias (f32), tiled per width position
    w2_ref: (3*WC2p, W*C2)         banded stage-2 weights, dy folded into K
    b2_ref: (1, W*C2)              stage-2 bias (f32)
    o_ref : (NB, H, W*C2)          output rows (lane-dense store)
    xpad_s: (NB, H+4, WC1p)        H-padded input slab (MXU dtype, VMEM scratch)
    mid_s : (NB, H+4, WC2p)        H-padded stage-1 activation (MXU dtype)
    """
    nb, h, wc1 = x_ref.shape
    wc2 = o_ref.shape[2]
    wc1p = xpad_s.shape[2]
    wc2p = mid_s.shape[2]
    top = _PAD_TOP
    f32 = jnp.float32

    # ---- In-kernel 'SAME' padding along H.  Halos are re-zeroed every step
    # (megacore-safe: no reliance on program_id==0 init), in 2-row pair-aligned
    # slabs so packed-bf16 stores never straddle a sublane pair.
    xpad_s[:, 0:top, :] = jnp.zeros((nb, top, wc1p), xpad_s.dtype)
    xpad_s[:, top + h:top + h + 2, :] = jnp.zeros((nb, 2, wc1p), xpad_s.dtype)
    mid_s[:, 0:top, :] = jnp.zeros((nb, top, wc2p), mid_s.dtype)
    mid_s[:, top + h:top + h + 2, :] = jnp.zeros((nb, 2, wc2p), mid_s.dtype)
    if wc1p != wc1:   # zero the lane-padding strip (keeps per-dy K blocks aligned)
        xpad_s[:, :, wc1:wc1p] = jnp.zeros((nb, h + top + 2, wc1p - wc1),
                                           xpad_s.dtype)
    if wc2p != wc2:
        mid_s[:, :, wc2:wc2p] = jnp.zeros((nb, h + top + 2, wc2p - wc2),
                                          mid_s.dtype)

    # Single cast into the MXU dtype at scratch-fill time (bf16 scratch: no
    # per-tap re-casts, half the scratch bytes / store traffic vs f32).
    xpad_s[:, top:top + h, 0:wc1] = x_ref[...].astype(xpad_s.dtype)

    def stage(src_pad, w_ref, b_ref):
        # 3x3 conv as ONE K-dense MXU contraction: the three dy-shifted row
        # slabs are concatenated along K (each K block is a multiple of 128
        # lanes, so the concat is vreg-aligned); the banded weights carry the
        # width taps + channel mixing.
        lhs = jnp.concatenate(
            [src_pad[:, top - 1 + dy:top - 1 + dy + h, :] for dy in range(3)],
            axis=2)
        lhs = lhs.reshape(nb * h, 3 * src_pad.shape[2])          # M = NB*H rows
        acc = jnp.dot(lhs, w_ref[...], preferred_element_type=f32)
        return jnp.maximum(acc + b_ref[...], 0.0)                # bias+ReLU in f32

    # Stage 1: activation never leaves VMEM (stored H-padded for stage 2).
    mid_s[:, top:top + h, 0:wc2] = (
        stage(xpad_s, w1_ref, b1_ref).reshape(nb, h, wc2).astype(mid_s.dtype))

    # Stage 2: lane-dense store (W*C2 is a multiple of 128 at these shapes).
    o_ref[...] = (
        stage(mid_s, w2_ref, b2_ref).reshape(nb, h, wc2).astype(o_ref.dtype))


def _round_up(x, m):
    return ((x + m - 1) // m) * m


def _pick_images_per_step(n, h, *, target_rows=256):
    """Images per grid step: fill M = NB*H toward the MXU row depth (128 on
    v5e, 256 on v6e/v7x) while keeping grid length >= 2 so both v7x TensorCores
    get work.  Only divisors of N are considered."""
    cap = max(1, target_rows // max(h, 1))
    divisors = [d for d in range(1, n + 1) if n % d == 0]
    cands = [d for d in divisors if d <= cap and n // d >= 2]
    if not cands:
        cands = [d for d in divisors if d <= cap] or [1]
    return max(cands)


def _banded_conv_weights(w_hwio, W, *, k_pad_to=128):
    """Fold a (3,3,Cin,Cout) conv kernel into a K-dense (3*WC1p, W*Cout) matrix.

    Row index = dy*WC1p + wi*Cin + ci, column = wo*Cout + co, value
    w[dy, wi-wo+1, ci, co] when 0 <= wi-wo+1 < 3 else 0 (width 'SAME' via band
    truncation).  Each per-dy K block is zero-padded to a multiple of
    `k_pad_to` lanes so the in-kernel dy concatenation stays vreg-aligned.
    """
    kh, kw, cin, cout = w_hwio.shape
    wi = jnp.arange(W)[:, None]
    wo = jnp.arange(W)[None, :]
    dx = wi - wo + (kw // 2)                               # (W, W) width-tap index
    valid = (dx >= 0) & (dx < kw)
    dx_c = jnp.clip(dx, 0, kw - 1)
    b = w_hwio[:, dx_c, :, :]                              # (kh, W, W, cin, cout)
    b = jnp.where(valid[None, :, :, None, None], b, 0.0)
    b = jnp.transpose(b, (0, 1, 3, 2, 4))                  # (kh, wi, cin, wo, cout)
    b = b.reshape(kh, W * cin, W * cout)
    wc_in = W * cin
    wc_in_p = _round_up(wc_in, k_pad_to)
    if wc_in_p != wc_in:
        b = jnp.pad(b, ((0, 0), (0, wc_in_p - wc_in), (0, 0)))
    return b.reshape(kh * wc_in_p, W * cout)


def _resident_spec(block_shape, index_map):
    """Weights/bias never change block index -> VMEM-resident; request single
    buffering so their footprint doesn't double (matters on v7x's 64 MiB VMEM
    once W*C grows)."""
    try:
        return pl.BlockSpec(block_shape, index_map, pipeline_mode=pl.Buffered(1))
    except TypeError:  # jax build without BlockSpec.pipeline_mode
        return pl.BlockSpec(block_shape, index_map)


def conv_block_apply_nhwc(x_nhwc, params, *, mxu_dtype=jnp.bfloat16,
                          images_per_step=None):
    """conv3x3+bias+ReLU twice; NHWC in / NHWC out (the hot path).

    NHWC -> (N, H, W*C) is a pure reshape, so there are no HBM layout shuffles
    outside the kernel.  Use `conv_block_forward` only for NCHW drop-in parity
    with the PyTorch module.
    """
    w1, b1, w2, b2 = params
    n, h, w, c1 = x_nhwc.shape
    c2 = w1.shape[-1]
    wc1, wc2 = w * c1, w * c2
    wc1p, wc2p = _round_up(wc1, 128), _round_up(wc2, 128)

    nb = (images_per_step if images_per_step is not None
          else _pick_images_per_step(n, h))
    if n % nb:
        raise ValueError(f"images_per_step={nb} must divide batch={n}")

    # TODO(synk): for large W*C the banded weights scale as (W*Cin)x(W*Cout)
    # and are only ~3/W dense; tile the W axis (or switch to a channel-dense
    # im2col contraction) before scaling — required to fit v7x's 64 MiB VMEM
    # and to stop wasting ~W/3x MXU FLOPs.

    x_rows = x_nhwc.reshape(n, h, wc1)                     # pure reshape, no HBM shuffle

    w1b = _banded_conv_weights(w1, w).astype(mxu_dtype)    # (3*wc1p, wc2)
    w2b = _banded_conv_weights(w2, w).astype(mxu_dtype)    # (3*wc2p, wc2)
    b1r = jnp.tile(b1.astype(jnp.float32), w).reshape(1, wc2)   # bias stays f32
    b2r = jnp.tile(b2.astype(jnp.float32), w).reshape(1, wc2)

    # VMEM budget derived from the actual buffers (+2x headroom), not a fixed cap.
    elt = jnp.dtype(mxu_dtype).itemsize
    io_elt = jnp.dtype(x_rows.dtype).itemsize
    vmem_need = (2 * nb * h * wc1 * io_elt                 # input blocks (double-buffered)
                 + 2 * nb * h * wc2 * io_elt               # output blocks (double-buffered)
                 + (3 * wc1p + 3 * wc2p) * wc2 * elt       # banded weights (single-buffered)
                 + 4 * wc2 * 4                             # biases (f32)
                 + nb * (h + 4) * (wc1p + wc2p) * elt)     # padded scratch slabs
    vmem_limit = int(min(max(2 * vmem_need, 16 * 1024 * 1024), 48 * 1024 * 1024))

    out_rows = pl.pallas_call(
        _fused_conv_block_kernel,
        out_shape=jax.ShapeDtypeStruct((n, h, wc2), x_nhwc.dtype),
        grid_spec=pltpu.PrefetchScalarGridSpec(
            num_scalar_prefetch=0,
            grid=(n // nb,),                               # NB images per step
            in_specs=[
                pl.BlockSpec((nb, h, wc1), lambda i: (i, 0, 0)),      # activations
                _resident_spec((3 * wc1p, wc2), lambda i: (0, 0)),    # stage-1 weights
                _resident_spec((1, wc2), lambda i: (0, 0)),           # stage-1 bias
                _resident_spec((3 * wc2p, wc2), lambda i: (0, 0)),    # stage-2 weights
                _resident_spec((1, wc2), lambda i: (0, 0)),           # stage-2 bias
            ],
            out_specs=pl.BlockSpec((nb, h, wc2), lambda i: (i, 0, 0)),
            scratch_shapes=[
                pltpu.VMEM((nb, h + _PAD_TOP + 2, wc1p), mxu_dtype),  # padded input slab
                pltpu.VMEM((nb, h + _PAD_TOP + 2, wc2p), mxu_dtype),  # padded stage-1 act
            ],
        ),
        compiler_params=pltpu.CompilerParams(
            dimension_semantics=("parallel",),             # batch axis -> both TCs on v7x
            vmem_limit_bytes=vmem_limit,
        ),
    )(x_rows, w1b, b1r, w2b, b2r)

    return out_rows.reshape(n, h, w, c2)


def conv_block_forward(x_nchw, params, *, mxu_dtype=jnp.bfloat16,
                       images_per_step=None):
    """PyTorch-compatible NCHW entry point (matches conv_block.forward).

    The NCHW<->NHWC transposes here are spec-compat plumbing only; prefer
    `conv_block_apply_nhwc` in an NHWC pipeline so no layout shuffles touch HBM.
    """
    x_nhwc = jnp.transpose(x_nchw, (0, 2, 3, 1))
    y = conv_block_apply_nhwc(x_nhwc, params, mxu_dtype=mxu_dtype,
                              images_per_step=images_per_step)
    return jnp.transpose(y, (0, 3, 1, 2))


def init_conv_block_params(key, ch_in, ch_out, dtype=jnp.float32):
    """Deterministic synthetic init (shapes match nn.Conv2d(ch, ch, 3, 1, 1, bias=True))."""
    k1, k2, k3, k4 = jax.random.split(key, 4)
    fan1 = ch_in * 9
    fan2 = ch_out * 9
    w1 = jax.random.normal(k1, (3, 3, ch_in, ch_out), dtype) * (1.0 / fan1) ** 0.5
    b1 = jax.random.normal(k2, (ch_out,), dtype) * 0.01
    w2 = jax.random.normal(k3, (3, 3, ch_out, ch_out), dtype) * (1.0 / fan2) ** 0.5
    b2 = jax.random.normal(k4, (ch_out,), dtype) * 0.01
    return (w1, b1, w2, b2)


def _reference_forward(x_nchw, params):
    """Pure-JAX (XLA conv) reference for correctness checking."""
    w1, b1, w2, b2 = params

    def stage(x, w_hwio, b):
        w_oihw = jnp.transpose(w_hwio, (3, 2, 0, 1))
        y = jax.lax.conv_general_dilated(
            x, w_oihw, window_strides=(1, 1), padding="SAME",
            dimension_numbers=("NCHW", "OIHW", "NCHW"))
        y = y + b.reshape(1, -1, 1, 1)
        return jnp.maximum(y, 0.0)

    return stage(stage(x_nchw, w1, b1), w2, b2)


if __name__ == "__main__":
    key = jax.random.PRNGKey(0)
    k_x, k_p, k_x2 = jax.random.split(key, 3)

    N, CH_IN, CH_OUT, H, W = 2, 4, 8, 16, 16
    x = jax.random.normal(k_x, (N, CH_IN, H, W), jnp.float32)
    params = init_conv_block_params(k_p, CH_IN, CH_OUT)

    ref = jax.block_until_ready(_reference_forward(x, params))

    # Full-precision MXU path: tight check against the XLA reference (NCHW API).
    out_f32 = jax.block_until_ready(
        conv_block_forward(x, params, mxu_dtype=jnp.float32))
    assert out_f32.shape == (N, CH_OUT, H, W)
    assert jnp.allclose(out_f32, ref, atol=1e-4, rtol=1e-4), "f32 mismatch vs reference"

    # Default bf16-MXU path (v6e/v7x perf): looser tolerance for bf16 rounding.
    out_bf16 = jax.block_until_ready(conv_block_forward(x, params))
    assert out_bf16.shape == (N, CH_OUT, H, W)
    assert jnp.allclose(out_bf16, ref, atol=5e-2, rtol=5e-2), "bf16 mismatch vs reference"

    # NHWC hot path (no wrapper transposes) with NB>1 batching (M = NB*H rows/step).
    N2 = 8
    x2 = jax.random.normal(k_x2, (N2, CH_IN, H, W), jnp.float32)
    ref2 = jax.block_until_ready(_reference_forward(x2, params))
    x2_nhwc = jnp.transpose(x2, (0, 2, 3, 1))      # test-harness layout prep only

    out2_f32 = jax.block_until_ready(
        conv_block_apply_nhwc(x2_nhwc, params, mxu_dtype=jnp.float32))
    assert out2_f32.shape == (N2, H, W, CH_OUT)
    assert jnp.allclose(jnp.transpose(out2_f32, (0, 3, 1, 2)), ref2,
                        atol=1e-4, rtol=1e-4), "batched f32 mismatch vs reference"

    out2_bf16 = jax.block_until_ready(conv_block_apply_nhwc(x2_nhwc, params))
    assert jnp.allclose(jnp.transpose(out2_bf16, (0, 3, 1, 2)), ref2,
                        atol=5e-2, rtol=5e-2), "batched bf16 mismatch vs reference"

    print("KERNEL_OK")
</pallas_src>

<mosaic_0001>
module attributes {stable_mosaic.version = 11 : i64} {
  func.func @_fused_conv_block_kernel(%arg0: i32, %arg1: memref<1x16x64xf32, #tpu.memory_space<vmem>>, %arg2: memref<384x128xf32, #tpu.memory_space<vmem>>, %arg3: memref<1x128xf32, #tpu.memory_space<vmem>>, %arg4: memref<384x128xf32, #tpu.memory_space<vmem>>, %arg5: memref<1x128xf32, #tpu.memory_space<vmem>>, %arg6: memref<1x16x128xf32, #tpu.memory_space<vmem>>, %arg7: memref<1x20x128xf32, #tpu.memory_space<vmem>>, %arg8: memref<1x20x128xf32, #tpu.memory_space<vmem>>) attributes {dimension_semantics = [#tpu.dimension_semantics<parallel>], iteration_bounds = array<i64: 2>, scalar_prefetch = 0 : i64, scratch_operands = 2 : i64, tpu.core_type = #tpu.core_type<tc>, window_params = [{transform_indices = @transform_0, window_bounds = array<i64: 1, 16, 64>}, {pipeline_mode = #tpu.pipeline_mode<synchronous>, transform_indices = @transform_1, window_bounds = array<i64: 384, 128>}, {pipeline_mode = #tpu.pipeline_mode<synchronous>, transform_indices = @transform_2, window_bounds = array<i64: 1, 128>}, {pipeline_mode = #tpu.pipeline_mode<synchronous>, transform_indices = @transform_3, window_bounds = array<i64: 384, 128>}, {pipeline_mode = #tpu.pipeline_mode<synchronous>, transform_indices = @transform_4, window_bounds = array<i64: 1, 128>}, {transform_indices = @transform_5, window_bounds = array<i64: 1, 16, 128>}]} {
    %cst = arith.constant 0.000000e+00 : f32
    %0 = vector.broadcast %cst : f32 to vector<1x2x128xf32>
    %c0 = arith.constant 0 : index
    %c0_0 = arith.constant 0 : index
    %c0_1 = arith.constant 0 : index
    %1 = vector.load %arg7[%c0, %c0_0, %c0_1] : memref<1x20x128xf32, #tpu.memory_space<vmem>>, vector<1x2x128xf32>
    tpu.vector_store %arg7[%c0, %c0_0, %c0_1], %0 {strides = array<i32>} : memref<1x20x128xf32, #tpu.memory_space<vmem>>, vector<1x2x128xf32>,
    %cst_2 = arith.constant 0.000000e+00 : f32
    %2 = vector.broadcast %cst_2 : f32 to vector<1x2x128xf32>
    %c0_3 = arith.constant 0 : index
    %c18 = arith.constant 18 : index
    %c0_4 = arith.constant 0 : index
    %3 = vector.load %arg7[%c0_3, %c18, %c0_4] : memref<1x20x128xf32, #tpu.memory_space<vmem>>, vector<1x2x128xf32>
    tpu.vector_store %arg7[%c0_3, %c18, %c0_4], %2 {strides = array<i32>} : memref<1x20x128xf32, #tpu.memory_space<vmem>>, vector<1x2x128xf32>,
    %cst_5 = arith.constant 0.000000e+00 : f32
    %4 = vector.broadcast %cst_5 : f32 to vector<1x2x128xf32>
    %c0_6 = arith.constant 0 : index
    %c0_7 = arith.constant 0 : index
    %c0_8 = arith.constant 0 : index
    %5 = vector.load %arg8[%c0_6, %c0_7, %c0_8] : memref<1x20x128xf32, #tpu.memory_space<vmem>>, vector<1x2x128xf32>
    tpu.vector_store %arg8[%c0_6, %c0_7, %c0_8], %4 {strides = array<i32>} : memref<1x20x128xf32, #tpu.memory_space<vmem>>, vector<1x2x128xf32>,
    %cst_9 = arith.constant 0.000000e+00 : f32
    %6 = vector.broadcast %cst_9 : f32 to vector<1x2x128xf32>
    %c0_10 = arith.constant 0 : index
    %c18_11 = arith.constant 18 : index
    %c0_12 = arith.constant 0 : index
    %7 = vector.load %arg8[%c0_10, %c18_11, %c0_12] : memref<1x20x128xf32, #tpu.memory_space<vmem>>, vector<1x2x128xf32>
    tpu.vector_store %arg8[%c0_10, %c18_11, %c0_12], %6 {strides = array<i32>} : memref<1x20x128xf32, #tpu.memory_space<vmem>>, vector<1x2x128xf32>,
    %cst_13 = arith.constant 0.000000e+00 : f32
    %8 = vector.broadcast %cst_13 : f32 to vector<1x20x64xf32>
    %c0_14 = arith.constant 0 : index
    %c0_15 = arith.constant 0 : index
    %c64 = arith.constant 64 : index
    %9 = vector.load %arg7[%c0_14, %c0_15, %c64] : memref<1x20x128xf32, #tpu.memory_space<vmem>>, vector<1x20x64xf32>
    tpu.vector_store %arg7[%c0_14, %c0_15, %c64], %8 {strides = array<i32>} : memref<1x20x128xf32, #tpu.memory_space<vmem>>, vector<1x20x64xf32>,
    %c0_16 = arith.constant 0 : index
    %c0_17 = arith.constant 0 : index
    %c0_18 = arith.constant 0 : index
    %10 = vector.load %arg1[%c0_16, %c0_17, %c0_18] : memref<1x16x64xf32, #tpu.memory_space<vmem>>, vector<1x16x64xf32>
    %c0_19 = arith.constant 0 : index
    %c2 = arith.constant 2 : index
    %c0_20 = arith.constant 0 : index
    %11 = vector.load %arg7[%c0_19, %c2, %c0_20] : memref<1x20x128xf32, #tpu.memory_space<vmem>>, vector<1x16x64xf32>
    tpu.vector_store %arg7[%c0_19, %c2, %c0_20], %10 {strides = array<i32>} : memref<1x20x128xf32, #tpu.memory_space<vmem>>, vector<1x16x64xf32>,
    %c0_21 = arith.constant 0 : index
    %c1 = arith.constant 1 : index
    %c0_22 = arith.constant 0 : index
    %12 = vector.load %arg7[%c0_21, %c1, %c0_22] : memref<1x20x128xf32, #tpu.memory_space<vmem>>, vector<1x16x128xf32>
    %c0_23 = arith.constant 0 : index
    %c2_24 = arith.constant 2 : index
    %c0_25 = arith.constant 0 : index
    %13 = vector.load %arg7[%c0_23, %c2_24, %c0_25] : memref<1x20x128xf32, #tpu.memory_space<vmem>>, vector<1x16x128xf32>
    %c0_26 = arith.constant 0 : index
    %c3 = arith.constant 3 : index
    %c0_27 = arith.constant 0 : index
    %14 = vector.load %arg7[%c0_26, %c3, %c0_27] : memref<1x20x128xf32, #tpu.memory_space<vmem>>, vector<1x16x128xf32>
    %15 = tpu.concatenate %12, %13, %14 in 2 : vector<1x16x128xf32>, vector<1x16x128xf32>, vector<1x16x128xf32> -> vector<1x16x384xf32>
    %16 = vector.shape_cast %15 : vector<1x16x384xf32> to vector<16x384xf32>
    %c0_28 = arith.constant 0 : index
    %c0_29 = arith.constant 0 : index
    %17 = vector.load %arg2[%c0_28, %c0_29] : memref<384x128xf32, #tpu.memory_space<vmem>>, vector<384x128xf32>
    %cst_30 = arith.constant dense<0.000000e+00> : vector<16x128xf32>
    %18 = tpu.matmul %16, %17, %cst_30 {dimension_numbers = #tpu.dot_dimension_numbers<[1], [0], [0], [1], [0, 0, 1, 1], [], []>} : vector<16x384xf32>, vector<384x128xf32>, vector<16x128xf32> -> vector<16x128xf32>
    %c0_31 = arith.constant 0 : index
    %c0_32 = arith.constant 0 : index
    %19 = vector.load %arg3[%c0_31, %c0_32] : memref<1x128xf32, #tpu.memory_space<vmem>>, vector<1x128xf32>
    %20 = vector.broadcast %19 : vector<1x128xf32> to vector<16x128xf32>
    %21 = arith.addf %18, %20 : vector<16x128xf32>
    %cst_33 = arith.constant 0.000000e+00 : f32
    %22 = vector.broadcast %cst_33 : f32 to vector<16x128xf32>
    %23 = arith.maximumf %21, %22 : vector<16x128xf32>
    %24 = vector.shape_cast %23 : vector<16x128xf32> to vector<1x16x128xf32>
    %c0_34 = arith.constant 0 : index
    %c2_35 = arith.constant 2 : index
    %c0_36 = arith.constant 0 : index
    %25 = vector.load %arg8[%c0_34, %c2_35, %c0_36] : memref<1x20x128xf32, #tpu.memory_space<vmem>>, vector<1x16x128xf32>
    tpu.vector_store %arg8[%c0_34, %c2_35, %c0_36], %24 {strides = array<i32>} : memref<1x20x128xf32, #tpu.memory_space<vmem>>, vector<1x16x128xf32>,
    %c0_37 = arith.constant 0 : index
    %c1_38 = arith.constant 1 : index
    %c0_39 = arith.constant 0 : index
    %26 = vector.load %arg8[%c0_37, %c1_38, %c0_39] : memref<1x20x128xf32, #tpu.memory_space<vmem>>, vector<1x16x128xf32>
    %c0_40 = arith.constant 0 : index
    %c2_41 = arith.constant 2 : index
    %c0_42 = arith.constant 0 : index
    %27 = vector.load %arg8[%c0_40, %c2_41, %c0_42] : memref<1x20x128xf32, #tpu.memory_space<vmem>>, vector<1x16x128xf32>
    %c0_43 = arith.constant 0 : index
    %c3_44 = arith.constant 3 : index
    %c0_45 = arith.constant 0 : index
    %28 = vector.load %arg8[%c0_43, %c3_44, %c0_45] : memref<1x20x128xf32, #tpu.memory_space<vmem>>, vector<1x16x128xf32>
    %29 = tpu.concatenate %26, %27, %28 in 2 : vector<1x16x128xf32>, vector<1x16x128xf32>, vector<1x16x128xf32> -> vector<1x16x384xf32>
    %30 = vector.shape_cast %29 : vector<1x16x384xf32> to vector<16x384xf32>
    %c0_46 = arith.constant 0 : index
    %c0_47 = arith.constant 0 : index
    %31 = vector.load %arg4[%c0_46, %c0_47] : memref<384x128xf32, #tpu.memory_space<vmem>>, vector<384x128xf32>
    %cst_48 = arith.constant dense<0.000000e+00> : vector<16x128xf32>
    %32 = tpu.matmul %30, %31, %cst_48 {dimension_numbers = #tpu.dot_dimension_numbers<[1], [0], [0], [1], [0, 0, 1, 1], [], []>} : vector<16x384xf32>, vector<384x128xf32>, vector<16x128xf32> -> vector<16x128xf32>
    %c0_49 = arith.constant 0 : index
    %c0_50 = arith.constant 0 : index
    %33 = vector.load %arg5[%c0_49, %c0_50] : memref<1x128xf32, #tpu.memory_space<vmem>>, vector<1x128xf32>
    %34 = vector.broadcast %33 : vector<1x128xf32> to vector<16x128xf32>
    %35 = arith.addf %32, %34 : vector<16x128xf32>
    %cst_51 = arith.constant 0.000000e+00 : f32
    %36 = vector.broadcast %cst_51 : f32 to vector<16x128xf32>
    %37 = arith.maximumf %35, %36 : vector<16x128xf32>
    %38 = vector.shape_cast %37 : vector<16x128xf32> to vector<1x16x128xf32>
    %c0_52 = arith.constant 0 : index
    %c0_53 = arith.constant 0 : index
    %c0_54 = arith.constant 0 : index
    %39 = vector.load %arg6[%c0_52, %c0_53, %c0_54] : memref<1x16x128xf32, #tpu.memory_space<vmem>>, vector<1x16x128xf32>
    tpu.vector_store %arg6[%c0_52, %c0_53, %c0_54], %38 {strides = array<i32>} : memref<1x16x128xf32, #tpu.memory_space<vmem>>, vector<1x16x128xf32>,
    return
  }
  func.func @transform_0(%arg0: i32) -> (i32, i32, i32) {
    %c0_i32 = arith.constant 0 : i32
    %c0_i32_0 = arith.constant 0 : i32
    %c0_i32_1 = arith.constant 0 : i32
    return %arg0, %c0_i32, %c0_i32_0 : i32, i32, i32
  }
  func.func @transform_1(%arg0: i32) -> (i32, i32) {
    %c0_i32 = arith.constant 0 : i32
    %c0_i32_0 = arith.constant 0 : i32
    %c0_i32_1 = arith.constant 0 : i32
    return %c0_i32, %c0_i32_0 : i32, i32
  }
  func.func @transform_2(%arg0: i32) -> (i32, i32) {
    %c0_i32 = arith.constant 0 : i32
    %c0_i32_0 = arith.constant 0 : i32
    %c0_i32_1 = arith.constant 0 : i32
    return %c0_i32, %c0_i32_0 : i32, i32
  }
  func.func @transform_3(%arg0: i32) -> (i32, i32) {
    %c0_i32 = arith.constant 0 : i32
    %c0_i32_0 = arith.constant 0 : i32
    %c0_i32_1 = arith.constant 0 : i32
    return %c0_i32, %c0_i32_0 : i32, i32
  }
  func.func @transform_4(%arg0: i32) -> (i32, i32) {
    %c0_i32 = arith.constant 0 : i32
    %c0_i32_0 = arith.constant 0 : i32
    %c0_i32_1 = arith.constant 0 : i32
    return %c0_i32, %c0_i32_0 : i32, i32
  }
  func.func @transform_5(%arg0: i32) -> (i32, i32, i32) {
    %c0_i32 = arith.constant 0 : i32
    %c0_i32_0 = arith.constant 0 : i32
    %c0_i32_1 = arith.constant 0 : i32
    return %arg0, %c0_i32, %c0_i32_0 : i32, i32, i32
  }
}

</mosaic_0001>

<llo_original>
// kernel: tpu_custom_call.1
$region0: #{tpu_custom_call.1}
  #allocation0 [shape = 'u32[]', space=smem, size = 0x4, offset = 0x4, fixed_abs, tag = 'smem constant byte address 0x4 - core index']
  #allocation1 [shape = 'u32[144,128]{1,0:T(1,128)}', space=vmem, size = 0x12000, scoped, tag = 'internal scratch']
  #allocation2 [shape = 'f32[1,20,128]{2,1,0:T(8,128)}', space=vmem, size = 0x3000, scoped, tag = 'scratch operand']
  #allocation3 [shape = 'f32[1,20,128]{2,1,0:T(8,128)}', space=vmem, size = 0x3000, scoped, tag = 'scratch operand']
  %s0 = inlined_call_operand.hbm [shape: f32[2,16,64], index: 0, kind: input, shape index: {}]
  %s1 = inlined_call_operand.hbm [shape: f32[384,128], index: 1, kind: input, shape index: {}]
  %s2 = inlined_call_operand.vmem [shape: f32[1,128], index: 2, kind: input, shape index: {}]
  %s3 = inlined_call_operand.hbm [shape: f32[384,128], index: 3, kind: input, shape index: {}]
  %s4 = inlined_call_operand.vmem [shape: f32[1,128], index: 4, kind: input, shape index: {}]
  %s5 = inlined_call_operand.hbm [shape: f32[2,16,128], index: 5, kind: output, shape index: {}]
  %s6 = sld [smem:[#allocation0]]
  $region65: #{tpu_custom_call.1} parent=0
    _
  %s8 = ssub.s32 1, %s6
  %s9 = scalar_select 0, %s8, %s6
  $region1: #{tpu_custom_call.1} parent=0
    #allocation4 [shape = 'u8[16384]{0}', space=vmem, size = 0x4000, scoped, tag = 'input window, operand 0']
    #allocation5 [shape = 's32[2]{0}', space=sflag, size = 0x8, scoped, tag = 'scoped memory for tpu_custom_call.1']
    #allocation6 [shape = 's32[2]{0}', space=sflag, size = 0x8, scoped, tag = 'scoped memory for tpu_custom_call.1']
    #allocation7 [shape = 'u8[196608]{0}', space=vmem, size = 0x30000, scoped, tag = 'input window, operand 1, single buffered']
    #allocation8 [shape = 's32[1]{0}', space=sflag, size = 0x4, scoped, tag = 'scoped memory for tpu_custom_call.1']
    #allocation9 [shape = 'u8[196608]{0}', space=vmem, size = 0x30000, scoped, tag = 'input window, operand 3, single buffered']
    #allocation10 [shape = 'u8[16384]{0}', space=vmem, size = 0x4000, scoped, tag = 'output window, operand 0']
    %10 = vsyncpa [#allocation5], 0
    %s11 = scalar_lea.sflag [#allocation5], 1
    %12 = vsyncpa %s11, 0
    %13 = vsyncpa [#allocation8], 0
    %14 = vsyncpa [#allocation6], 0
    %s15 = scalar_lea.sflag [#allocation6], 1
    %16 = vsyncpa %s15, 0
    loop: start=0, step=1, limit=4
    $region2: #{tpu_custom_call.1} parent=1 // loop_pre_header
      _
    $region3: #{tpu_custom_call.1} parent=1 // loop_header
      %s18 = sphi 0, %s22
      %p19 = scmp.ge.s32.totalorder %s18, 4
      %s28 = sphi 0, %s30
      %s31 = sphi 0, %s28
      %s32 = sphi 0, %s31
      %s48 = sphi 0, %s32
      %s52 = sphi 0, %s52
      %s54 = sphi 0, %s52
      %s55 = sphi 0, %s54
      %s69 = sphi 0, %s55
      %s73 = sphi 0, %s73
      %s75 = sphi 0, %s73
      %s76 = sphi 0, %s75
      %s90 = sphi 0, %s76
      %s94 = sphi 0, %s94
      %s96 = sphi 0, %s94
      %s97 = sphi 0, %s96
      %s111 = sphi 0, %s97
      %s115 = sphi 0, %s115
      %s117 = sphi 0, %s115
      %s118 = sphi 0, %s117
      %s132 = sphi 0, %s118
      %s138 = sphi 0, %s140
      %s141 = sphi 0, %s138
      %s142 = sphi 0, %s141
      %s158 = sphi 0, %s142
    $region4: #{tpu_custom_call.1} parent=1 // loop_header_branch
      %21 = sbr.rel (%p19) target = $region8
    $region5: #{tpu_custom_call.1} parent=1 // loop_body
      %s23 = ssub.s32 %s18, 1
      %s24 = ssub.s32 %s18, 2
      %s25 = sadd.s32 %s18, 1
      %s26 = ssub.s32 %s18, %s25
      %p27 = scmp.eq.s32.totalorder %s26, 0
      %s29 = sadd.s32 %s28, 1
      %s30 = scalar_select %p27, %s28, %s29
      %p33 = pneg %p27
      %p34 = scmp.eq.s32.totalorder %s18, 1
      %p35 = por %p33, %p34
      %p36 = scmp.ne.s32.totalorder %s28, %s31
      %p37 = scmp.eq.s32.totalorder %s18, 0
      %p38 = por %p36, %p37
      %p39 = scmp.ne.s32.totalorder %s28, %s31
      %p40 = scmp.eq.s32.totalorder %s23, 1
      %p41 = por %p39, %p40
      %p42 = scmp.ne.s32.totalorder %s31, %s32
      %p43 = scmp.eq.s32.totalorder %s23, 0
      %p44 = por %p42, %p43
      %p45 = scmp.ne.s32.totalorder %s31, %s32
      %p46 = scmp.eq.s32.totalorder %s24, 1
      %p47 = por %p45, %p46
      %p49 = scmp.ne.s32.totalorder %s32, %s48
      %p50 = scmp.eq.s32.totalorder %s24, 0
      %p51 = por %p49, %p50
      %s53 = sadd.s32 %s52, 1
      %p56 = scmp.eq.s32.totalorder %s18, 1
      %p57 = scmp.ne.s32.totalorder %s52, %s54
      %p58 = scmp.eq.s32.totalorder %s18, 0
      %p59 = por %p57, %p58
      %p60 = scmp.ne.s32.totalorder %s52, %s54
      %p61 = scmp.eq.s32.totalorder %s23, 1
      %p62 = por %p60, %p61
      %p63 = scmp.ne.s32.totalorder %s54, %s55
      %p64 = scmp.eq.s32.totalorder %s23, 0
      %p65 = por %p63, %p64
      %p66 = scmp.ne.s32.totalorder %s54, %s55
      %p67 = scmp.eq.s32.totalorder %s24, 1
      %p68 = por %p66, %p67
      %p70 = scmp.ne.s32.totalorder %s55, %s69
      %p71 = scmp.eq.s32.totalorder %s24, 0
      %p72 = por %p70, %p71
      %s74 = sadd.s32 %s73, 1
      %p77 = scmp.eq.s32.totalorder %s18, 1
      %p78 = scmp.ne.s32.totalorder %s73, %s75
      %p79 = scmp.eq.s32.totalorder %s18, 0
      %p80 = por %p78, %p79
      %p81 = scmp.ne.s32.totalorder %s73, %s75
      %p82 = scmp.eq.s32.totalorder %s23, 1
      %p83 = por %p81, %p82
      %p84 = scmp.ne.s32.totalorder %s75, %s76
      %p85 = scmp.eq.s32.totalorder %s23, 0
      %p86 = por %p84, %p85
      %p87 = scmp.ne.s32.totalorder %s75, %s76
      %p88 = scmp.eq.s32.totalorder %s24, 1
      %p89 = por %p87, %p88
      %p91 = scmp.ne.s32.totalorder %s76, %s90
      %p92 = scmp.eq.s32.totalorder %s24, 0
      %p93 = por %p91, %p92
      %s95 = sadd.s32 %s94, 1
      %p98 = scmp.eq.s32.totalorder %s18, 1
      %p99 = scmp.ne.s32.totalorder %s94, %s96
      %p100 = scmp.eq.s32.totalorder %s18, 0
      %p101 = por %p99, %p100
      %p102 = scmp.ne.s32.totalorder %s94, %s96
      %p103 = scmp.eq.s32.totalorder %s23, 1
      %p104 = por %p102, %p103
      %p105 = scmp.ne.s32.totalorder %s96, %s97
      %p106 = scmp.eq.s32.totalorder %s23, 0
      %p107 = por %p105, %p106
      %p108 = scmp.ne.s32.totalorder %s96, %s97
      %p109 = scmp.eq.s32.totalorder %s24, 1
      %p110 = por %p108, %p109
      %p112 = scmp.ne.s32.totalorder %s97, %s111
      %p113 = scmp.eq.s32.totalorder %s24, 0
      %p114 = por %p112, %p113
      %s116 = sadd.s32 %s115, 1
      %p119 = scmp.eq.s32.totalorder %s18, 1
      %p120 = scmp.ne.s32.totalorder %s115, %s117
      %p121 = scmp.eq.s32.totalorder %s18, 0
      %p122 = por %p120, %p121
      %p123 = scmp.ne.s32.totalorder %s115, %s117
      %p124 = scmp.eq.s32.totalorder %s23, 1
      %p125 = por %p123, %p124
      %p126 = scmp.ne.s32.totalorder %s117, %s118
      %p127 = scmp.eq.s32.totalorder %s23, 0
      %p128 = por %p126, %p127
      %p129 = scmp.ne.s32.totalorder %s117, %s118
      %p130 = scmp.eq.s32.totalorder %s24, 1
      %p131 = por %p129, %p130
      %p133 = scmp.ne.s32.totalorder %s118, %s132
      %p134 = scmp.eq.s32.totalorder %s24, 0
      %p135 = por %p133, %p134
      %s136 = ssub.s32 %s18, %s25
      %p137 = scmp.eq.s32.totalorder %s136, 0
      %s139 = sadd.s32 %s138, 1
      %s140 = scalar_select %p137, %s138, %s139
      %p143 = pneg %p137
      %p144 = scmp.eq.s32.totalorder %s18, 1
      %p145 = por %p143, %p144
      %p146 = scmp.ne.s32.totalorder %s138, %s141
      %p147 = scmp.eq.s32.totalorder %s18, 0
      %p148 = por %p146, %p147
      %p149 = scmp.ne.s32.totalorder %s138, %s141
      %p150 = scmp.eq.s32.totalorder %s23, 1
      %p151 = por %p149, %p150
      %p152 = scmp.ne.s32.totalorder %s141, %s142
      %p153 = scmp.eq.s32.totalorder %s23, 0
      %p154 = por %p152, %p153
      %p155 = scmp.ne.s32.totalorder %s141, %s142
      %p156 = scmp.eq.s32.totalorder %s24, 1
      %p157 = por %p155, %p156
      %p159 = scmp.ne.s32.totalorder %s142, %s158
      %p160 = scmp.eq.s32.totalorder %s24, 0
      %p161 = por %p159, %p160
      %p162 = scmp.le.s32.totalorder 1, %s18
      %p163 = scmp.lt.s32.totalorder %s18, 3
      %p164 = pnand %p162, %p163
      %p165 = pneg %p164
      // Predicated region
      $region9: #{tpu_custom_call.1} parent=5 // pred_check
        _
      $region10: #{tpu_custom_call.1} parent=5 // pred_check_branch
        %167 = sbr.rel (%p164) target = $region12
      $region11: #{tpu_custom_call.1} parent=5 // pred_region
        %s168 = ssub.s32 %s18, 1
        // Predicated region
        $region13: #{tpu_custom_call.1} parent=11 // pred_check
          %p169 = pneg %p65
        $region14: #{tpu_custom_call.1} parent=11 // pred_check_branch
          %171 = sbr.rel (%p169) target = $region16
        $region15: #{tpu_custom_call.1} parent=11 // pred_region
          %s173 = ssub.s32 6144, 6144
          %174 = vsyncadd [#allocation8], %s173
          %s175 = sshll.u32 [#allocation7], 4
          %s176 = int_to_ptr.vmem [resolvable:$true] %s175
          %181 = dma.hbm_to_vmem [thread:$0]  %s1, 6144, %s176, [#allocation8], 128, 128, 8
        $region16: #{tpu_custom_call.1} parent=11 // pred_fallthru
          _
        // Predicated region
        $region17: #{tpu_custom_call.1} parent=11 // pred_check
          %p182 = pneg %p86
        $region18: #{tpu_custom_call.1} parent=11 // pred_check_branch
          %184 = sbr.rel (%p182) target = $region20
        $region19: #{tpu_custom_call.1} parent=11 // pred_region
          _
        $region20: #{tpu_custom_call.1} parent=11 // pred_fallthru
          _
        // Predicated region
        $region21: #{tpu_custom_call.1} parent=11 // pred_check
          %p185 = pneg %p107
        $region22: #{tpu_custom_call.1} parent=11 // pred_check_branch
          %187 = sbr.rel (%p185) target = $region24
        $region23: #{tpu_custom_call.1} parent=11 // pred_region
          %s189 = ssub.s32 6144, 6144
          %190 = vsyncadd [#allocation8], %s189
          %s191 = sshll.u32 [#allocation9], 4
          %s192 = int_to_ptr.vmem [resolvable:$true] %s191
          %197 = dma.hbm_to_vmem [thread:$0]  %s3, 6144, %s192, [#allocation8], 128, 128, 8
        $region24: #{tpu_custom_call.1} parent=11 // pred_fallthru
          _
        // Predicated region
        $region25: #{tpu_custom_call.1} parent=11 // pred_check
          %p198 = pneg %p128
        $region26: #{tpu_custom_call.1} parent=11 // pred_check_branch
          %200 = sbr.rel (%p198) target = $region28
        $region27: #{tpu_custom_call.1} parent=11 // pred_region
          _
        $region28: #{tpu_custom_call.1} parent=11 // pred_fallthru
          _
      $region12: #{tpu_custom_call.1} parent=5 // pred_fallthru
        _
      %p201 = scmp.lt.s32.totalorder %s18, 2
      // Predicated region
      $region29: #{tpu_custom_call.1} parent=5 // pred_check
        %p202 = pneg %p201
      $region30: #{tpu_custom_call.1} parent=5 // pred_check_branch
        %204 = sbr.rel (%p202) target = $region32
      $region31: #{tpu_custom_call.1} parent=5 // pred_region
        // Predicated region
        $region33: #{tpu_custom_call.1} parent=31 // pred_check
          %p205 = pneg %p38
        $region34: #{tpu_custom_call.1} parent=31 // pred_check_branch
          %207 = sbr.rel (%p205) target = $region36
        $region35: #{tpu_custom_call.1} parent=31 // pred_region
          %s208 = sand.u32 %s28, 1
          %s209 = scalar_lea.sflag [#allocation5], %s208
          %s210 = sand.u32 %s28, 1
          %s211 = smul.addr %s210, 16
          %s212 = scalar_lea.vmem [#allocation4], %s211
          %s214 = ssub.s32 256, 256
          %215 = vsyncadd %s209, %s214
          %s216 = smul.addr %s18, 2
          %s217 = smul.addr %s216, 128
          %s218 = scalar_lea.hbm %s0, %s217
          %s219 = sshll.u32 %s212, 4
          %s220 = int_to_ptr.vmem [resolvable:$true] %s219
          %225 = dma.hbm_to_vmem [thread:$0]  %s218, 256, %s220, %s209, 128, 128, 8
        $region36: #{tpu_custom_call.1} parent=31 // pred_fallthru
          _
      $region32: #{tpu_custom_call.1} parent=5 // pred_fallthru
        _
      %p226 = scmp.le.s32.totalorder 1, %s18
      %p227 = scmp.lt.s32.totalorder %s18, 3
      %p228 = pnand %p226, %p227
      %p229 = pneg %p228
      // Predicated region
      $region37: #{tpu_custom_call.1} parent=5 // pred_check
        _
      $region38: #{tpu_custom_call.1} parent=5 // pred_check_branch
        %231 = sbr.rel (%p228) target = $region40
      $region39: #{tpu_custom_call.1} parent=5 // pred_region
        %s232 = ssub.s32 %s18, 1
        %s233 = sand.u32 %s31, 1
        %s234 = scalar_lea.sflag [#allocation5], %s233
        %s235 = sand.u32 %s31, 1
        %s236 = smul.addr %s235, 16
        %s237 = scalar_lea.vmem [#allocation4], %s236
        // Predicated region
        $region41: #{tpu_custom_call.1} parent=39 // pred_check
          %p238 = pneg %p44
        $region42: #{tpu_custom_call.1} parent=39 // pred_check_branch
          %240 = sbr.rel (%p238) target = $region44
        $region43: #{tpu_custom_call.1} parent=39 // pred_region
          %241 = dma.done %s234, 256
        $region44: #{tpu_custom_call.1} parent=39 // pred_fallthru
          _
        // Predicated region
        $region45: #{tpu_custom_call.1} parent=39 // pred_check
          %p242 = pneg %p65
        $region46: #{tpu_custom_call.1} parent=39 // pred_check_branch
          %244 = sbr.rel (%p242) target = $region48
        $region47: #{tpu_custom_call.1} parent=39 // pred_region
          %245 = dma.done [#allocation8], 6144
        $region48: #{tpu_custom_call.1} parent=39 // pred_fallthru
          _
        // Predicated region
        $region49: #{tpu_custom_call.1} parent=39 // pred_check
          %p246 = pneg %p107
        $region50: #{tpu_custom_call.1} parent=39 // pred_check_branch
          %248 = sbr.rel (%p246) target = $region52
        $region51: #{tpu_custom_call.1} parent=39 // pred_region
          %249 = dma.done [#allocation8], 6144
        $region52: #{tpu_custom_call.1} parent=39 // pred_fallthru
          _
        %s250 = sand.u32 %s31, 1
        %s251 = scalar_lea.sflag [#allocation5], %s250
        %s252 = sand.u32 %s31, 1
        %s253 = smul.addr %s252, 16
        %s254 = scalar_lea.vmem [#allocation4], %s253
        %p255 = pneg %p44
        %p256 = pneg %p41
        %p257 = pneg %p65
        %p258 = pneg %p62
        %p259 = pneg %p86
        %p260 = pneg %p83
        %p261 = pneg %p107
        %p262 = pneg %p104
        %p263 = pneg %p128
        %p264 = pneg %p125
        %p265 = pneg %p154
        %p266 = pneg %p151
        %s267 = sand.u32 %s141, 1
        %s268 = scalar_lea.sflag [#allocation6], %s267
        %s269 = sand.u32 %s141, 1
        %s270 = smul.addr %s269, 16
        %s271 = scalar_lea.vmem [#allocation10], %s270
        %272 = vst [vmem:[#allocation2] sm:$0x3] 0.0
        %273 = vst [vmem:[#allocation2 + $0x12] sm:$0x3] 0.0
        %274 = vst [vmem:[#allocation3] sm:$0x3] 0.0
        %275 = vst [vmem:[#allocation3 + $0x12] sm:$0x3] 0.0
        %vm276 = vcmask 1048064
        %277 = vst.msk [vmem:[#allocation2] sm:$0xff] %vm276, 0.0
        %278 = vst.msk [vmem:[#allocation2 + $0x8] sm:$0xff] %vm276, 0.0
        %vm279 = vcmask 1043968
        %280 = vst.msk [vmem:[#allocation2 + $0x10] sm:$0xf] %vm279, 0.0
        %v281 = vld [vmem:[%s237] sm:$0xff]
        %v282 = vld [vmem:[%s237 + $0x8] sm:$0xff]
        %vm283 = vcmask 523264
        %284 = vst.msk [vmem:[#allocation2 + $0x2] sm:$0xff] %vm283, %v281
        %285 = vst.msk [vmem:[#allocation2 + $0xa] sm:$0xff] %vm283, %v282
        %v286 = vld [vmem:[#allocation2 + $0x1] sm:$0xff]
        %v287 = vld [vmem:[#allocation2 + $0x9] sm:$0xff]
        %v288 = vld [vmem:[#allocation2 + $0x2] sm:$0xff]
        %v289 = vld [vmem:[#allocation2 + $0xa] sm:$0xff]
        %v290 = vld [vmem:[#allocation2 + $0x3] sm:$0xff]
        %v291 = vld [vmem:[#allocation2 + $0xb] sm:$0xff]
        %v292 = vld [vmem:[#allocation7] sm:$0xff]
        %v293 = vld [vmem:[#allocation7 + $0x8] sm:$0xff]
        %v294 = vld [vmem:[#allocation7 + $0x10] sm:$0xff]
        %v295 = vld [vmem:[#allocation7 + $0x18] sm:$0xff]
        %v296 = vld [vmem:[#allocation7 + $0x20] sm:$0xff]
        %v297 = vld [vmem:[#allocation7 + $0x28] sm:$0xff]
        %v298 = vld [vmem:[#allocation7 + $0x30] sm:$0xff]
        %v299 = vld [vmem:[#allocation7 + $0x38] sm:$0xff]
        %v300 = vld [vmem:[#allocation7 + $0x40] sm:$0xff]
        %v301 = vld [vmem:[#allocation7 + $0x48] sm:$0xff]
        %v302 = vld [vmem:[#allocation7 + $0x50] sm:$0xff]
        %v303 = vld [vmem:[#allocation7 + $0x58] sm:$0xff]
        %v304 = vld [vmem:[#allocation7 + $0x60] sm:$0xff]
        %v305 = vld [vmem:[#allocation7 + $0x68] sm:$0xff]
        %v306 = vld [vmem:[#allocation7 + $0x70] sm:$0xff]
        %v307 = vld [vmem:[#allocation7 + $0x78] sm:$0xff]
        %v308 = vld [vmem:[#allocation7 + $0x80] sm:$0xff]
        %v309 = vld [vmem:[#allocation7 + $0x88] sm:$0xff]
        %v310 = vld [vmem:[#allocation7 + $0x90] sm:$0xff]
        %v311 = vld [vmem:[#allocation7 + $0x98] sm:$0xff]
        %v312 = vld [vmem:[#allocation7 + $0xa0] sm:$0xff]
        %v313 = vld [vmem:[#allocation7 + $0xa8] sm:$0xff]
        %v314 = vld [vmem:[#allocation7 + $0xb0] sm:$0xff]
        %v315 = vld [vmem:[#allocation7 + $0xb8] sm:$0xff]
        %v316 = vld [vmem:[#allocation7 + $0xc0] sm:$0xff]
        %v317 = vld [vmem:[#allocation7 + $0xc8] sm:$0xff]
        %v318 = vld [vmem:[#allocation7 + $0xd0] sm:$0xff]
        %v319 = vld [vmem:[#allocation7 + $0xd8] sm:$0xff]
        %v320 = vld [vmem:[#allocation7 + $0xe0] sm:$0xff]
        %v321 = vld [vmem:[#allocation7 + $0xe8] sm:$0xff]
        %v322 = vld [vmem:[#allocation7 + $0xf0] sm:$0xff]
        %v323 = vld [vmem:[#allocation7 + $0xf8] sm:$0xff]
        %v324 = vld [vmem:[#allocation7 + $0x100] sm:$0xff]
        %v325 = vld [vmem:[#allocation7 + $0x108] sm:$0xff]
        %v326 = vld [vmem:[#allocation7 + $0x110] sm:$0xff]
        %v327 = vld [vmem:[#allocation7 + $0x118] sm:$0xff]
        %v328 = vld [vmem:[#allocation7 + $0x120] sm:$0xff]
        %v329 = vld [vmem:[#allocation7 + $0x128] sm:$0xff]
        %v330 = vld [vmem:[#allocation7 + $0x130] sm:$0xff]
        %v331 = vld [vmem:[#allocation7 + $0x138] sm:$0xff]
        %v332 = vld [vmem:[#allocation7 + $0x140] sm:$0xff]
        %v333 = vld [vmem:[#allocation7 + $0x148] sm:$0xff]
        %v334 = vld [vmem:[#allocation7 + $0x150] sm:$0xff]
        %v335 = vld [vmem:[#allocation7 + $0x158] sm:$0xff]
        %v336 = vld [vmem:[#allocation7 + $0x160] sm:$0xff]
        %v337 = vld [vmem:[#allocation7 + $0x168] sm:$0xff]
        %v338 = vld [vmem:[#allocation7 + $0x170] sm:$0xff]
        %v339 = vld [vmem:[#allocation7 + $0x178] sm:$0xff]
        %v340 = vld [vmem:[%s2] sm:$0x1]
        %v342 = vlaneseq
        %v343 = vshrl.u32 %v342, 7
        %v344 = vsub.s32 0, %v343
        %v345 = vrot.slane %v340, %v344
        %347 = vmatprep.subr.mxu0 0.0
        %348 = vmatpush1.msra.mxu0 %v292
        %349 = vmatprep.subr.mxu0 0.0
        %350 = vmatpush1.msra.mxu0 %v293
        %351 = vmatprep.subr.mxu0 0.0
        %352 = vmatpush1.msra.mxu0 %v294
        %353 = vmatprep.subr.mxu0 0.0
        %354 = vmatpush1.msra.mxu0 %v295
        %355 = vmatprep.subr.mxu0 0.0
        %356 = vmatpush1.msra.mxu0 %v296
        %357 = vmatprep.subr.mxu0 0.0
        %358 = vmatpush1.msra.mxu0 %v297
        %359 = vmatprep.subr.mxu0 0.0
        %360 = vmatpush1.msra.mxu0 %v298
        %361 = vmatprep.subr.mxu0 0.0
        %362 = vmatpush1.msra.mxu0 %v299
        %363 = vmatprep.subr.mxu0 0.0
        %364 = vmatpush1.msra.mxu0 %v300
        %365 = vmatprep.subr.mxu0 0.0
        %366 = vmatpush1.msra.mxu0 %v301
        %367 = vmatprep.subr.mxu0 0.0
        %368 = vmatpush1.msra.mxu0 %v302
        %369 = vmatprep.subr.mxu0 0.0
        %370 = vmatpush1.msra.mxu0 %v303
        %371 = vmatprep.subr.mxu0 0.0
        %372 = vmatpush1.msra.mxu0 %v304
        %373 = vmatprep.subr.mxu0 0.0
        %374 = vmatpush1.msra.mxu0 %v305
        %375 = vmatprep.subr.mxu0 0.0
        %376 = vmatpush1.msra.mxu0 %v306
        %377 = vmatprep.subr.mxu0 0.0
        %378 = vmatpush1.msra.mxu0 %v307
        %379 = vmatprep.subr.mxu0 0.0
        %380 = vmatpush1.msra.mxu0 %v308
        %381 = vmatprep.subr.mxu0 0.0
        %382 = vmatpush1.msra.mxu0 %v309
        %383 = vmatprep.subr.mxu0 0.0
        %384 = vmatpush1.msra.mxu0 %v310
        %385 = vmatprep.subr.mxu0 0.0
        %386 = vmatpush1.msra.mxu0 %v311
        %387 = vmatprep.subr.mxu0 0.0
        %388 = vmatpush1.msra.mxu0 %v312
        %389 = vmatprep.subr.mxu0 0.0
        %390 = vmatpush1.msra.mxu0 %v313
        %391 = vmatprep.subr.mxu0 0.0
        %392 = vmatpush1.msra.mxu0 %v314
        %393 = vmatprep.subr.mxu0 0.0
        %394 = vmatpush1.msra.mxu0 %v315
        %395 = vmatprep.subr.mxu0 0.0
        %396 = vmatpush1.msra.mxu0 %v316
        %397 = vmatprep.subr.mxu0 0.0
        %398 = vmatpush1.msra.mxu0 %v317
        %399 = vmatprep.subr.mxu0 0.0
        %400 = vmatpush1.msra.mxu0 %v318
        %401 = vmatprep.subr.mxu0 0.0
        %402 = vmatpush1.msra.mxu0 %v319
        %403 = vmatprep.subr.mxu0 0.0
        %404 = vmatpush1.msra.mxu0 %v320
        %405 = vmatprep.subr.mxu0 0.0
        %406 = vmatpush1.msra.mxu0 %v321
        %407 = vmatprep.subr.mxu0 0.0
        %408 = vmatpush1.msra.mxu0 %v322
        %409 = vmatprep.subr.mxu0 0.0
        %410 = vmatpush1.msra.mxu0 %v323
        %411 = vmatprep.mubr.f32.mxu0 %v288
        %412 = vmatmul.mubr.f32.gmra.mrb[0].mxu0 %v286
        %v413 = vpop.f32.mrb[0].mxu0
        %v414 = vadd.f32 %v345, %v413
        %v415 = vpop.f32.mrb[0].mxu0
        %416 = vmatprep.mubr.f32.mxu0 %v289
        %417 = vmatmul.mubr.f32.gmra.mrb[0].mxu0 %v287
        %v418 = vpop.f32.mrb[0].mxu0
        %v419 = vadd.f32 %v345, %v418
        %v420 = vpop.f32.mrb[0].mxu0
        %421 = vdwg.mxu0
        %422 = vmatprep.subr.mxu0 0.0
        %423 = vmatpush1.msra.mxu0 %v324
        %424 = vmatprep.subr.mxu0 0.0
        %425 = vmatpush1.msra.mxu0 %v325
        %426 = vmatprep.subr.mxu0 0.0
        %427 = vmatpush1.msra.mxu0 %v326
        %428 = vmatprep.subr.mxu0 0.0
        %429 = vmatpush1.msra.mxu0 %v327
        %430 = vmatprep.subr.mxu0 0.0
        %431 = vmatpush1.msra.mxu0 %v328
        %432 = vmatprep.subr.mxu0 0.0
        %433 = vmatpush1.msra.mxu0 %v329
        %434 = vmatprep.subr.mxu0 0.0
        %435 = vmatpush1.msra.mxu0 %v330
        %436 = vmatprep.subr.mxu0 0.0
        %437 = vmatpush1.msra.mxu0 %v331
        %438 = vmatprep.subr.mxu0 0.0
        %439 = vmatpush1.msra.mxu0 %v332
        %440 = vmatprep.subr.mxu0 0.0
        %441 = vmatpush1.msra.mxu0 %v333
        %442 = vmatprep.subr.mxu0 0.0
        %443 = vmatpush1.msra.mxu0 %v334
        %444 = vmatprep.subr.mxu0 0.0
        %445 = vmatpush1.msra.mxu0 %v335
        %446 = vmatprep.subr.mxu0 0.0
        %447 = vmatpush1.msra.mxu0 %v336
        %448 = vmatprep.subr.mxu0 0.0
        %449 = vmatpush1.msra.mxu0 %v337
        %450 = vmatprep.subr.mxu0 0.0
        %451 = vmatpush1.msra.mxu0 %v338
        %452 = vmatprep.subr.mxu0 0.0
        %453 = vmatpush1.msra.mxu0 %v339
        %454 = vmatprep.subr.mxu0 0.0
        %455 = vmatpush1.msra.mxu0 0.0
        %456 = vmatprep.subr.mxu0 0.0
        %457 = vmatpush1.msra.mxu0 0.0
        %458 = vmatprep.subr.mxu0 0.0
        %459 = vmatpush1.msra.mxu0 0.0
        %460 = vmatprep.subr.mxu0 0.0
        %461 = vmatpush1.msra.mxu0 0.0
        %462 = vmatprep.subr.mxu0 0.0
        %463 = vmatpush1.msra.mxu0 0.0
        %464 = vmatprep.subr.mxu0 0.0
        %465 = vmatpush1.msra.mxu0 0.0
        %466 = vmatprep.subr.mxu0 0.0
        %467 = vmatpush1.msra.mxu0 0.0
        %468 = vmatprep.subr.mxu0 0.0
        %469 = vmatpush1.msra.mxu0 0.0
        %470 = vmatprep.subr.mxu0 0.0
        %471 = vmatpush1.msra.mxu0 0.0
        %472 = vmatprep.subr.mxu0 0.0
        %473 = vmatpush1.msra.mxu0 0.0
        %474 = vmatprep.subr.mxu0 0.0
        %475 = vmatpush1.msra.mxu0 0.0
        %476 = vmatprep.subr.mxu0 0.0
        %477 = vmatpush1.msra.mxu0 0.0
        %478 = vmatprep.subr.mxu0 0.0
        %479 = vmatpush1.msra.mxu0 0.0
        %480 = vmatprep.subr.mxu0 0.0
        %481 = vmatpush1.msra.mxu0 0.0
        %482 = vmatprep.subr.mxu0 0.0
        %483 = vmatpush1.msra.mxu0 0.0
        %484 = vmatprep.subr.mxu0 0.0
        %485 = vmatpush1.msra.mxu0 0.0
        %486 = vmatprep.mubr.f32.mxu0 0.0
        %487 = vmatmul.mubr.f32.gmra.mrb[0].mxu0 %v290
        %v488 = vpop.f32.mrb[0].mxu0
        %v489 = vadd.f32 %v414, %v488
        %v490 = vpop.f32.mrb[0].mxu0
        %491 = vmatprep.mubr.f32.mxu0 0.0
        %492 = vmatmul.mubr.f32.gmra.mrb[0].mxu0 %v291
        %v493 = vpop.f32.mrb[0].mxu0
        %v494 = vadd.f32 %v419, %v493
        %v495 = vpop.f32.mrb[0].mxu0
        %496 = vdwg.mxu0
        %v497 = vmax.f32 %v489, 0.0
        %v498 = vmax.f32 %v494, 0.0
        %499 = vst [vmem:[#allocation3 + $0x2] sm:$0xff] %v497
        %500 = vst [vmem:[#allocation3 + $0xa] sm:$0xff] %v498
        %v501 = vld [vmem:[#allocation3 + $0x1] sm:$0xff]
        %v502 = vld [vmem:[#allocation3 + $0x9] sm:$0xff]
        %v503 = vld [vmem:[#allocation3 + $0x2] sm:$0xff]
        %v504 = vld [vmem:[#allocation3 + $0xa] sm:$0xff]
        %v505 = vld [vmem:[#allocation3 + $0x3] sm:$0xff]
        %v506 = vld [vmem:[#allocation3 + $0xb] sm:$0xff]
        %v507 = vld [vmem:[#allocation9] sm:$0xff]
        %v508 = vld [vmem:[#allocation9 + $0x8] sm:$0xff]
        %v509 = vld [vmem:[#allocation9 + $0x10] sm:$0xff]
        %v510 = vld [vmem:[#allocation9 + $0x18] sm:$0xff]
        %v511 = vld [vmem:[#allocation9 + $0x20] sm:$0xff]
        %v512 = vld [vmem:[#allocation9 + $0x28] sm:$0xff]
        %v513 = vld [vmem:[#allocation9 + $0x30] sm:$0xff]
        %v514 = vld [vmem:[#allocation9 + $0x38] sm:$0xff]
        %v515 = vld [vmem:[#allocation9 + $0x40] sm:$0xff]
        %v516 = vld [vmem:[#allocation9 + $0x48] sm:$0xff]
        %v517 = vld [vmem:[#allocation9 + $0x50] sm:$0xff]
        %v518 = vld [vmem:[#allocation9 + $0x58] sm:$0xff]
        %v519 = vld [vmem:[#allocation9 + $0x60] sm:$0xff]
        %v520 = vld [vmem:[#allocation9 + $0x68] sm:$0xff]
        %v521 = vld [vmem:[#allocation9 + $0x70] sm:$0xff]
        %v522 = vld [vmem:[#allocation9 + $0x78] sm:$0xff]
        %v523 = vld [vmem:[#allocation9 + $0x80] sm:$0xff]
        %v524 = vld [vmem:[#allocation9 + $0x88] sm:$0xff]
        %v525 = vld [vmem:[#allocation9 + $0x90] sm:$0xff]
        %v526 = vld [vmem:[#allocation9 + $0x98] sm:$0xff]
        %v527 = vld [vmem:[#allocation9 + $0xa0] sm:$0xff]
        %v528 = vld [vmem:[#allocation9 + $0xa8] sm:$0xff]
        %v529 = vld [vmem:[#allocation9 + $0xb0] sm:$0xff]
        %v530 = vld [vmem:[#allocation9 + $0xb8] sm:$0xff]
        %v531 = vld [vmem:[#allocation9 + $0xc0] sm:$0xff]
        %v532 = vld [vmem:[#allocation9 + $0xc8] sm:$0xff]
        %v533 = vld [vmem:[#allocation9 + $0xd0] sm:$0xff]
        %v534 = vld [vmem:[#allocation9 + $0xd8] sm:$0xff]
        %v535 = vld [vmem:[#allocation9 + $0xe0] sm:$0xff]
        %v536 = vld [vmem:[#allocation9 + $0xe8] sm:$0xff]
        %v537 = vld [vmem:[#allocation9 + $0xf0] sm:$0xff]
        %v538 = vld [vmem:[#allocation9 + $0xf8] sm:$0xff]
        %v539 = vld [vmem:[#allocation9 + $0x100] sm:$0xff]
        %v540 = vld [vmem:[#allocation9 + $0x108] sm:$0xff]
        %v541 = vld [vmem:[#allocation9 + $0x110] sm:$0xff]
        %v542 = vld [vmem:[#allocation9 + $0x118] sm:$0xff]
        %v543 = vld [vmem:[#allocation9 + $0x120] sm:$0xff]
        %v544 = vld [vmem:[#allocation9 + $0x128] sm:$0xff]
        %v545 = vld [vmem:[#allocation9 + $0x130] sm:$0xff]
        %v546 = vld [vmem:[#allocation9 + $0x138] sm:$0xff]
        %v547 = vld [vmem:[#allocation9 + $0x140] sm:$0xff]
        %v548 = vld [vmem:[#allocation9 + $0x148] sm:$0xff]
        %v549 = vld [vmem:[#allocation9 + $0x150] sm:$0xff]
        %v550 = vld [vmem:[#allocation9 + $0x158] sm:$0xff]
        %v551 = vld [vmem:[#allocation9 + $0x160] sm:$0xff]
        %v552 = vld [vmem:[#allocation9 + $0x168] sm:$0xff]
        %v553 = vld [vmem:[#allocation9 + $0x170] sm:$0xff]
        %v554 = vld [vmem:[#allocation9 + $0x178] sm:$0xff]
        %v555 = vld [vmem:[%s4] sm:$0x1]
        %v557 = vlaneseq
        %v558 = vshrl.u32 %v557, 7
        %v559 = vsub.s32 0, %v558
        %v560 = vrot.slane %v555, %v559
        %562 = vmatprep.subr.mxu0 0.0
        %563 = vmatpush1.msra.mxu0 %v507
        %564 = vmatprep.subr.mxu0 0.0
        %565 = vmatpush1.msra.mxu0 %v508
        %566 = vmatprep.subr.mxu0 0.0
        %567 = vmatpush1.msra.mxu0 %v509
        %568 = vmatprep.subr.mxu0 0.0
        %569 = vmatpush1.msra.mxu0 %v510
        %570 = vmatprep.subr.mxu0 0.0
        %571 = vmatpush1.msra.mxu0 %v511
        %572 = vmatprep.subr.mxu0 0.0
        %573 = vmatpush1.msra.mxu0 %v512
        %574 = vmatprep.subr.mxu0 0.0
        %575 = vmatpush1.msra.mxu0 %v513
        %576 = vmatprep.subr.mxu0 0.0
        %577 = vmatpush1.msra.mxu0 %v514
        %578 = vmatprep.subr.mxu0 0.0
        %579 = vmatpush1.msra.mxu0 %v515
        %580 = vmatprep.subr.mxu0 0.0
        %581 = vmatpush1.msra.mxu0 %v516
        %582 = vmatprep.subr.mxu0 0.0
        %583 = vmatpush1.msra.mxu0 %v517
        %584 = vmatprep.subr.mxu0 0.0
        %585 = vmatpush1.msra.mxu0 %v518
        %586 = vmatprep.subr.mxu0 0.0
        %587 = vmatpush1.msra.mxu0 %v519
        %588 = vmatprep.subr.mxu0 0.0
        %589 = vmatpush1.msra.mxu0 %v520
        %590 = vmatprep.subr.mxu0 0.0
        %591 = vmatpush1.msra.mxu0 %v521
        %592 = vmatprep.subr.mxu0 0.0
        %593 = vmatpush1.msra.mxu0 %v522
        %594 = vmatprep.subr.mxu0 0.0
        %595 = vmatpush1.msra.mxu0 %v523
        %596 = vmatprep.subr.mxu0 0.0
        %597 = vmatpush1.msra.mxu0 %v524
        %598 = vmatprep.subr.mxu0 0.0
        %599 = vmatpush1.msra.mxu0 %v525
        %600 = vmatprep.subr.mxu0 0.0
        %601 = vmatpush1.msra.mxu0 %v526
        %602 = vmatprep.subr.mxu0 0.0
        %603 = vmatpush1.msra.mxu0 %v527
        %604 = vmatprep.subr.mxu0 0.0
        %605 = vmatpush1.msra.mxu0 %v528
        %606 = vmatprep.subr.mxu0 0.0
        %607 = vmatpush1.msra.mxu0 %v529
        %608 = vmatprep.subr.mxu0 0.0
        %609 = vmatpush1.msra.mxu0 %v530
        %610 = vmatprep.subr.mxu0 0.0
        %611 = vmatpush1.msra.mxu0 %v531
        %612 = vmatprep.subr.mxu0 0.0
        %613 = vmatpush1.msra.mxu0 %v532
        %614 = vmatprep.subr.mxu0 0.0
        %615 = vmatpush1.msra.mxu0 %v533
        %616 = vmatprep.subr.mxu0 0.0
        %617 = vmatpush1.msra.mxu0 %v534
        %618 = vmatprep.subr.mxu0 0.0
        %619 = vmatpush1.msra.mxu0 %v535
        %620 = vmatprep.subr.mxu0 0.0
        %621 = vmatpush1.msra.mxu0 %v536
        %622 = vmatprep.subr.mxu0 0.0
        %623 = vmatpush1.msra.mxu0 %v537
        %624 = vmatprep.subr.mxu0 0.0
        %625 = vmatpush1.msra.mxu0 %v538
        %626 = vmatprep.mubr.f32.mxu0 %v503
        %627 = vmatmul.mubr.f32.gmra.mrb[0].mxu0 %v501
        %v628 = vpop.f32.mrb[0].mxu0
        %v629 = vadd.f32 %v560, %v628
        %v630 = vpop.f32.mrb[0].mxu0
        %631 = vmatprep.mubr.f32.mxu0 %v504
        %632 = vmatmul.mubr.f32.gmra.mrb[0].mxu0 %v502
        %v633 = vpop.f32.mrb[0].mxu0
        %v634 = vadd.f32 %v560, %v633
        %v635 = vpop.f32.mrb[0].mxu0
        %636 = vdwg.mxu0
        %637 = vmatprep.subr.mxu0 0.0
        %638 = vmatpush1.msra.mxu0 %v539
        %639 = vmatprep.subr.mxu0 0.0
        %640 = vmatpush1.msra.mxu0 %v540
        %641 = vmatprep.subr.mxu0 0.0
        %642 = vmatpush1.msra.mxu0 %v541
        %643 = vmatprep.subr.mxu0 0.0
        %644 = vmatpush1.msra.mxu0 %v542
        %645 = vmatprep.subr.mxu0 0.0
        %646 = vmatpush1.msra.mxu0 %v543
        %647 = vmatprep.subr.mxu0 0.0
        %648 = vmatpush1.msra.mxu0 %v544
        %649 = vmatprep.subr.mxu0 0.0
        %650 = vmatpush1.msra.mxu0 %v545
        %651 = vmatprep.subr.mxu0 0.0
        %652 = vmatpush1.msra.mxu0 %v546
        %653 = vmatprep.subr.mxu0 0.0
        %654 = vmatpush1.msra.mxu0 %v547
        %655 = vmatprep.subr.mxu0 0.0
        %656 = vmatpush1.msra.mxu0 %v548
        %657 = vmatprep.subr.mxu0 0.0
        %658 = vmatpush1.msra.mxu0 %v549
        %659 = vmatprep.subr.mxu0 0.0
        %660 = vmatpush1.msra.mxu0 %v550
        %661 = vmatprep.subr.mxu0 0.0
        %662 = vmatpush1.msra.mxu0 %v551
        %663 = vmatprep.subr.mxu0 0.0
        %664 = vmatpush1.msra.mxu0 %v552
        %665 = vmatprep.subr.mxu0 0.0
        %666 = vmatpush1.msra.mxu0 %v553
        %667 = vmatprep.subr.mxu0 0.0
        %668 = vmatpush1.msra.mxu0 %v554
        %669 = vmatprep.subr.mxu0 0.0
        %670 = vmatpush1.msra.mxu0 0.0
        %671 = vmatprep.subr.mxu0 0.0
        %672 = vmatpush1.msra.mxu0 0.0
        %673 = vmatprep.subr.mxu0 0.0
        %674 = vmatpush1.msra.mxu0 0.0
        %675 = vmatprep.subr.mxu0 0.0
        %676 = vmatpush1.msra.mxu0 0.0
        %677 = vmatprep.subr.mxu0 0.0
        %678 = vmatpush1.msra.mxu0 0.0
        %679 = vmatprep.subr.mxu0 0.0
        %680 = vmatpush1.msra.mxu0 0.0
        %681 = vmatprep.subr.mxu0 0.0
        %682 = vmatpush1.msra.mxu0 0.0
        %683 = vmatprep.subr.mxu0 0.0
        %684 = vmatpush1.msra.mxu0 0.0
        %685 = vmatprep.subr.mxu0 0.0
        %686 = vmatpush1.msra.mxu0 0.0
        %687 = vmatprep.subr.mxu0 0.0
        %688 = vmatpush1.msra.mxu0 0.0
        %689 = vmatprep.subr.mxu0 0.0
        %690 = vmatpush1.msra.mxu0 0.0
        %691 = vmatprep.subr.mxu0 0.0
        %692 = vmatpush1.msra.mxu0 0.0
        %693 = vmatprep.subr.mxu0 0.0
        %694 = vmatpush1.msra.mxu0 0.0
        %695 = vmatprep.subr.mxu0 0.0
        %696 = vmatpush1.msra.mxu0 0.0
        %697 = vmatprep.subr.mxu0 0.0
        %698 = vmatpush1.msra.mxu0 0.0
        %699 = vmatprep.subr.mxu0 0.0
        %700 = vmatpush1.msra.mxu0 0.0
        %701 = vmatprep.mubr.f32.mxu0 0.0
        %702 = vmatmul.mubr.f32.gmra.mrb[0].mxu0 %v505
        %v703 = vpop.f32.mrb[0].mxu0
        %v704 = vadd.f32 %v629, %v703
        %v705 = vpop.f32.mrb[0].mxu0
        %706 = vmatprep.mubr.f32.mxu0 0.0
        %707 = vmatmul.mubr.f32.gmra.mrb[0].mxu0 %v506
        %v708 = vpop.f32.mrb[0].mxu0
        %v709 = vadd.f32 %v634, %v708
        %v710 = vpop.f32.mrb[0].mxu0
        %711 = vdwg.mxu0
        %v712 = vmax.f32 %v704, 0.0
        %v713 = vmax.f32 %v709, 0.0
        %714 = vst [vmem:[%s271] sm:$0xff] %v712
        %715 = vst [vmem:[%s271 + $0x8] sm:$0xff] %v713
        %s716 = sand.u32 %s141, 1
        %s717 = scalar_lea.sflag [#allocation6], %s716
        %s718 = sand.u32 %s141, 1
        %s719 = smul.addr %s718, 16
        %s720 = scalar_lea.vmem [#allocation10], %s719
        // Predicated region
        $region53: #{tpu_custom_call.1} parent=39 // pred_check
          %p721 = pneg %p151
        $region54: #{tpu_custom_call.1} parent=39 // pred_check_branch
          %723 = sbr.rel (%p721) target = $region56
        $region55: #{tpu_custom_call.1} parent=39 // pred_region
          %s725 = ssub.s32 256, 256
          %726 = vsyncadd %s717, %s725
          %s727 = smul.addr %s23, 2
          %s728 = smul.addr %s727, 128
          %s729 = scalar_lea.hbm %s5, %s728
          %s730 = sshll.u32 %s720, 4
          %s731 = int_to_ptr.vmem [resolvable:$true] %s730
          %736 = dma.vmem_to_hbm [thread:$0]  %s731, 256, %s729, %s717, 128, 128, 8
        $region56: #{tpu_custom_call.1} parent=39 // pred_fallthru
          _
      $region40: #{tpu_custom_call.1} parent=5 // pred_fallthru
        _
      %p737 = scmp.le.s32.totalorder 2, %s18
      // Predicated region
      $region57: #{tpu_custom_call.1} parent=5 // pred_check
        %p738 = pneg %p737
      $region58: #{tpu_custom_call.1} parent=5 // pred_check_branch
        %740 = sbr.rel (%p738) target = $region60
      $region59: #{tpu_custom_call.1} parent=5 // pred_region
        %s741 = ssub.s32 %s18, 2
        // Predicated region
        $region61: #{tpu_custom_call.1} parent=59 // pred_check
          %p742 = pneg %p157
        $region62: #{tpu_custom_call.1} parent=59 // pred_check_branch
          %744 = sbr.rel (%p742) target = $region64
        $region63: #{tpu_custom_call.1} parent=59 // pred_region
          %s745 = sand.u32 %s142, 1
          %s746 = scalar_lea.sflag [#allocation6], %s745
          %s747 = sand.u32 %s142, 1
          %s748 = smul.addr %s747, 16
          %s749 = scalar_lea.vmem [#allocation10], %s748
          %750 = dma.done %s746, 256
        $region64: #{tpu_custom_call.1} parent=59 // pred_fallthru
          _
      $region60: #{tpu_custom_call.1} parent=5 // pred_fallthru
        _
    $region6: #{tpu_custom_call.1} parent=1 // loop_footer
      %s22 = sadd.s32 1, %s18
    $region7: #{tpu_custom_call.1} parent=1 // loop_footer_branch
      %17 = sbr.rel target = $region3
    $region8: #{tpu_custom_call.1} parent=1 // loop_exit
      _
    %751 = vsyncpa [#allocation5], 1
    %s752 = scalar_lea.sflag [#allocation5], 1
    %753 = vsyncpa %s752, 1
    %754 = vsyncpa [#allocation8], 1
    %755 = vsyncpa [#allocation6], 1
    %s756 = scalar_lea.sflag [#allocation6], 1
    %757 = vsyncpa %s756, 1

</llo_original>
